<compile_context>
chip_gen: v6e
topology: v6e:2x2x1
jax: 0.10.0
libtpu: 0.0.40
codegen_flags: <defaults>
</compile_context>

<pallas_src>
import functools

import jax
import jax.numpy as jnp
from jax.experimental import pallas as pl
from jax.experimental.pallas import tpu as pltpu

_MiB = 1024 * 1024


def _round_up(n, m):
    return ((n + m - 1) // m) * m


def _choose_hidden_tile(H, target):
    """Largest multiple of 128 <= target that divides H; else full H."""
    if H <= max(target, 128):
        return H
    cand = (min(target, H) // 128) * 128
    while cand >= 128:
        if H % cand == 0:
            return cand
        cand -= 128
    return H  # no aligned divisor; keep the hidden dim un-tiled (correctness first)


@functools.lru_cache(maxsize=1)
def _vmem_capacity_bytes():
    try:
        return int(pltpu.get_tpu_info().vmem_capacity_bytes)
    except Exception:
        return 64 * _MiB  # conservative (v7x-sized) fallback


def _vmem_limit_bytes(tm, D, th, x_dtype, w_dtype):
    xs = jnp.dtype(x_dtype).itemsize
    ws = jnp.dtype(w_dtype).itemsize
    tiles = (
        2 * tm * D * xs          # x row tile (double-buffered)
        + 2 * D * th * ws        # W1 column tile (streamed, double-buffered)
        + 2 * th * 4             # b1 tile (f32)
        + 2 * th * D * ws        # W2 row tile (streamed, double-buffered)
        + 2 * D * 4              # b2 (f32)
        + 2 * tm * D * xs        # output row tile
        + tm * D * 4             # f32 accumulator scratch
        + tm * th * (4 + ws)     # (tm, th) f32 intermediate + cast copy
    )
    cap = _vmem_capacity_bytes()
    budget = int(tiles * 1.5) + 8 * _MiB
    return max(32 * _MiB, min(budget, cap - 8 * _MiB))


def _ffn_kernel(x_ref, w1_ref, b1_ref, w2_ref, b2_ref, o_ref, acc_ref, *,
                negative_slope):
    # x_ref: (tm, D)   w1_ref: (D, th)  b1_ref: (1, th) f32
    # w2_ref: (th, D)  b2_ref: (1, D) f32
    # o_ref:  (tm, D)  acc_ref: (tm, D) f32 scratch
    j = pl.program_id(1)

    @pl.when(j == 0)
    def _():
        acc_ref[...] = jnp.zeros_like(acc_ref)

    # First linear (hidden tile): native-dtype MXU operands, f32 accumulation.
    h = jnp.dot(x_ref[...], w1_ref[...], preferred_element_type=jnp.float32)
    h = h + b1_ref[...]

    # LeakyReLU (PyTorch default negative_slope = 0.01): vmul + vmax.
    h = jnp.maximum(h, negative_slope * h)

    # Dropout(p) in eval mode == identity.
    # TODO(synk): training-mode dropout mask not emitted.

    # Second linear partial product over this hidden tile; accumulate in f32.
    acc_ref[...] += jnp.dot(h.astype(w2_ref.dtype), w2_ref[...],
                            preferred_element_type=jnp.float32)

    @pl.when(j == pl.num_programs(1) - 1)
    def _():
        o_ref[...] = (acc_ref[...] + b2_ref[...]).astype(o_ref.dtype)


@functools.lru_cache(maxsize=None)
def _build_ffn_call(M_pad, D, H, tm, th, x_dtype, w_dtype, out_dtype,
                    negative_slope):
    grid_m = pl.cdiv(M_pad, tm)
    grid_h = pl.cdiv(H, th)
    kernel = functools.partial(_ffn_kernel, negative_slope=negative_slope)
    return pl.pallas_call(
        kernel,
        out_shape=jax.ShapeDtypeStruct((M_pad, D), out_dtype),
        grid_spec=pltpu.PrefetchScalarGridSpec(
            num_scalar_prefetch=0,
            grid=(grid_m, grid_h),
            in_specs=[
                pl.BlockSpec((tm, D), lambda i, j: (i, 0)),   # x rows (resident over j)
                pl.BlockSpec((D, th), lambda i, j: (0, j)),   # W1 column tile (streamed)
                pl.BlockSpec((1, th), lambda i, j: (0, j)),   # b1 tile (f32)
                pl.BlockSpec((th, D), lambda i, j: (j, 0)),   # W2 row tile (streamed)
                pl.BlockSpec((1, D), lambda i, j: (0, 0)),    # b2 (f32)
            ],
            out_specs=pl.BlockSpec((tm, D), lambda i, j: (i, 0)),
            scratch_shapes=[pltpu.VMEM((tm, D), jnp.float32)],
        ),
        compiler_params=pltpu.CompilerParams(
            dimension_semantics=("parallel", "arbitrary"),
            vmem_limit_bytes=_vmem_limit_bytes(tm, D, th, x_dtype, w_dtype),
        ),
    )


@functools.partial(
    jax.jit,
    static_argnames=("negative_slope", "tm", "th", "cast_operands_to_bf16"))
def feedforward_pallas(x, w1, b1, w2, b2, *, negative_slope=0.01,
                       tm=512, th=512, cast_operands_to_bf16=False):
    """x: (..., D). w1: (D, H), b1: (H,), w2: (H, D), b2: (D,)."""
    orig_shape = x.shape
    out_dtype = x.dtype
    D = orig_shape[-1]
    H = w1.shape[1]

    if cast_operands_to_bf16:
        # bf16 MXU operand path (f32 accumulation preserved in-kernel).
        x = x.astype(jnp.bfloat16)
        w1 = w1.astype(jnp.bfloat16)
        w2 = w2.astype(jnp.bfloat16)

    x2d = x.reshape(-1, D)
    M = x2d.shape[0]

    # Pad rows only to the sublane alignment; the ragged last row tile is
    # handled by the cdiv grid (out-of-bounds reads are row-local garbage,
    # out-of-bounds writes are masked).
    row_align = 8 if x2d.dtype.itemsize >= 4 else 16
    M_pad = _round_up(M, row_align)
    if M_pad != M:
        x2d = jnp.pad(x2d, ((0, M_pad - M), (0, 0)))

    tm_eff = max(row_align, min(_round_up(tm, row_align), M_pad))
    # Ensure >=2 row-grid steps when possible so the parallel axis can shard
    # across both TensorCores on v7x (no-op on single-TC chips).
    if pl.cdiv(M_pad, tm_eff) < 2 and M_pad >= 2 * row_align:
        tm_eff = max(row_align, _round_up(pl.cdiv(M_pad, 2), row_align))

    th_eff = _choose_hidden_tile(H, th)

    # Pre-cast biases to the f32 accumulate dtype once (not per grid step).
    b1_f32 = b1.reshape(1, H).astype(jnp.float32)
    b2_f32 = b2.reshape(1, D).astype(jnp.float32)

    call = _build_ffn_call(M_pad, D, H, tm_eff, th_eff,
                           jnp.dtype(x2d.dtype), jnp.dtype(w1.dtype),
                           jnp.dtype(out_dtype), float(negative_slope))
    out2d = call(x2d, w1, b1_f32, w2, b2_f32)

    if M_pad != M:
        out2d = out2d[:M]
    return out2d.reshape(orig_shape)


def _reference(x, w1, b1, w2, b2, negative_slope=0.01):
    h = x @ w1 + b1
    h = jnp.where(h > 0, h, negative_slope * h)
    return h @ w2 + b2


if __name__ == "__main__":
    # Module hyperparameters (synthetic, deterministic init).
    model_dim = 128
    hidden_dim = 256
    dropout_rate = 0.1  # identity at inference

    batch, seq = 2, 8

    key = jax.random.PRNGKey(0)
    kx, k1, kb1, k2, kb2 = jax.random.split(key, 5)

    x = jax.random.normal(kx, (batch, seq, model_dim), dtype=jnp.float32)

    # nn.Linear(model_dim, hidden_dim): PyTorch weight (hidden, model) stored
    # transposed here as (model, hidden).
    bound1 = 1.0 / (model_dim ** 0.5)
    w1 = jax.random.uniform(k1, (model_dim, hidden_dim), minval=-bound1,
                            maxval=bound1, dtype=jnp.float32)
    b1 = jax.random.uniform(kb1, (hidden_dim,), minval=-bound1, maxval=bound1,
                            dtype=jnp.float32)

    # nn.Linear(hidden_dim, model_dim)
    bound2 = 1.0 / (hidden_dim ** 0.5)
    w2 = jax.random.uniform(k2, (hidden_dim, model_dim), minval=-bound2,
                            maxval=bound2, dtype=jnp.float32)
    b2 = jax.random.uniform(kb2, (model_dim,), minval=-bound2, maxval=bound2,
                            dtype=jnp.float32)

    ref = _reference(x, w1, b1, w2, b2)

    # f32 path (matches reference up to accumulation order).
    out = jax.block_until_ready(feedforward_pallas(x, w1, b1, w2, b2))
    assert out.shape == x.shape
    assert jnp.allclose(out, ref, atol=1e-4, rtol=1e-4), "f32 mismatch vs reference"

    # Exercise the hidden-dim-tiled accumulator path (grid axis over H).
    out_htiled = jax.block_until_ready(
        feedforward_pallas(x, w1, b1, w2, b2, th=128))
    assert jnp.allclose(out_htiled, ref, atol=1e-4, rtol=1e-4), \
        "H-tiled mismatch vs reference"

    # bf16-operand MXU path (f32 accumulation) -- looser tolerance.
    out_bf16 = jax.block_until_ready(
        feedforward_pallas(x, w1, b1, w2, b2, cast_operands_to_bf16=True))
    assert out_bf16.shape == x.shape
    assert jnp.allclose(out_bf16.astype(jnp.float32), ref, atol=5e-2, rtol=5e-2), \
        "bf16 mismatch vs reference"

    # Ragged row count (exercises sublane padding + masked last tile; 3*5=15
    # rows -> padded to 16, split across two 8-row tiles).
    x_ragged = jax.random.normal(jax.random.PRNGKey(1), (3, 5, model_dim),
                                 dtype=jnp.float32)
    out_ragged = jax.block_until_ready(
        feedforward_pallas(x_ragged, w1, b1, w2, b2))
    ref_ragged = _reference(x_ragged, w1, b1, w2, b2)
    assert out_ragged.shape == x_ragged.shape
    assert jnp.allclose(out_ragged, ref_ragged, atol=1e-4, rtol=1e-4), \
        "ragged mismatch vs reference"

    print("KERNEL_OK")
</pallas_src>

<mosaic_0001>
module attributes {stable_mosaic.version = 11 : i64} {
  func.func @_ffn_kernel(%arg0: i32, %arg1: i32, %arg2: memref<8x128xf32, #tpu.memory_space<vmem>>, %arg3: memref<128x256xf32, #tpu.memory_space<vmem>>, %arg4: memref<1x256xf32, #tpu.memory_space<vmem>>, %arg5: memref<256x128xf32, #tpu.memory_space<vmem>>, %arg6: memref<1x128xf32, #tpu.memory_space<vmem>>, %arg7: memref<8x128xf32, #tpu.memory_space<vmem>>, %arg8: memref<8x128xf32, #tpu.memory_space<vmem>>) attributes {dimension_semantics = [#tpu.dimension_semantics<parallel>, #tpu.dimension_semantics<arbitrary>], iteration_bounds = array<i64: 2, 1>, scalar_prefetch = 0 : i64, scratch_operands = 1 : i64, tpu.core_type = #tpu.core_type<tc>, window_params = [{transform_indices = @transform_0, window_bounds = array<i64: 8, 128>}, {transform_indices = @transform_1, window_bounds = array<i64: 128, 256>}, {transform_indices = @transform_2, window_bounds = array<i64: 1, 256>}, {transform_indices = @transform_3, window_bounds = array<i64: 256, 128>}, {pipeline_mode = #tpu.pipeline_mode<synchronous>, transform_indices = @transform_4, window_bounds = array<i64: 1, 128>}, {transform_indices = @transform_5, window_bounds = array<i64: 8, 128>}]} {
    %c0_i32 = arith.constant 0 : i32
    %0 = arith.cmpi eq, %arg1, %c0_i32 : i32
    %1 = arith.extui %0 : i1 to i32
    %c0_i32_0 = arith.constant 0 : i32
    %2 = arith.cmpi ne, %1, %c0_i32_0 : i32
    scf.if %2 {
      %cst_16 = arith.constant 0.000000e+00 : f32
      %20 = vector.broadcast %cst_16 : f32 to vector<8x128xf32>
      %c0_17 = arith.constant 0 : index
      %c0_18 = arith.constant 0 : index
      %21 = vector.load %arg8[%c0_17, %c0_18] : memref<8x128xf32, #tpu.memory_space<vmem>>, vector<8x128xf32>
      tpu.vector_store %arg8[%c0_17, %c0_18], %20 {strides = array<i32>} : memref<8x128xf32, #tpu.memory_space<vmem>>, vector<8x128xf32>,
    } else {
    }
    %c0 = arith.constant 0 : index
    %c0_1 = arith.constant 0 : index
    %3 = vector.load %arg2[%c0, %c0_1] : memref<8x128xf32, #tpu.memory_space<vmem>>, vector<8x128xf32>
    %c0_2 = arith.constant 0 : index
    %c0_3 = arith.constant 0 : index
    %4 = vector.load %arg3[%c0_2, %c0_3] : memref<128x256xf32, #tpu.memory_space<vmem>>, vector<128x256xf32>
    %cst = arith.constant dense<0.000000e+00> : vector<8x256xf32>
    %5 = tpu.matmul %3, %4, %cst {dimension_numbers = #tpu.dot_dimension_numbers<[1], [0], [0], [1], [0, 0, 1, 1], [], []>} : vector<8x128xf32>, vector<128x256xf32>, vector<8x256xf32> -> vector<8x256xf32>
    %c0_4 = arith.constant 0 : index
    %c0_5 = arith.constant 0 : index
    %6 = vector.load %arg4[%c0_4, %c0_5] : memref<1x256xf32, #tpu.memory_space<vmem>>, vector<1x256xf32>
    %7 = vector.broadcast %6 : vector<1x256xf32> to vector<8x256xf32>
    %8 = arith.addf %5, %7 : vector<8x256xf32>
    %cst_6 = arith.constant 0.00999999977 : f32
    %9 = vector.broadcast %cst_6 : f32 to vector<8x256xf32>
    %10 = arith.mulf %9, %8 : vector<8x256xf32>
    %11 = arith.maximumf %8, %10 : vector<8x256xf32>
    %c0_7 = arith.constant 0 : index
    %c0_8 = arith.constant 0 : index
    %12 = vector.load %arg8[%c0_7, %c0_8] : memref<8x128xf32, #tpu.memory_space<vmem>>, vector<8x128xf32>
    %c0_9 = arith.constant 0 : index
    %c0_10 = arith.constant 0 : index
    %13 = vector.load %arg5[%c0_9, %c0_10] : memref<256x128xf32, #tpu.memory_space<vmem>>, vector<256x128xf32>
    %cst_11 = arith.constant dense<0.000000e+00> : vector<8x128xf32>
    %14 = tpu.matmul %11, %13, %cst_11 {dimension_numbers = #tpu.dot_dimension_numbers<[1], [0], [0], [1], [0, 0, 1, 1], [], []>} : vector<8x256xf32>, vector<256x128xf32>, vector<8x128xf32> -> vector<8x128xf32>
    %15 = arith.addf %12, %14 : vector<8x128xf32>
    %c0_12 = arith.constant 0 : index
    %c0_13 = arith.constant 0 : index
    %16 = vector.load %arg8[%c0_12, %c0_13] : memref<8x128xf32, #tpu.memory_space<vmem>>, vector<8x128xf32>
    tpu.vector_store %arg8[%c0_12, %c0_13], %15 {strides = array<i32>} : memref<8x128xf32, #tpu.memory_space<vmem>>, vector<8x128xf32>,
    %c0_i32_14 = arith.constant 0 : i32
    %17 = arith.cmpi eq, %arg1, %c0_i32_14 : i32
    %18 = arith.extui %17 : i1 to i32
    %c0_i32_15 = arith.constant 0 : i32
    %19 = arith.cmpi ne, %18, %c0_i32_15 : i32
    scf.if %19 {
      %c0_16 = arith.constant 0 : index
      %c0_17 = arith.constant 0 : index
      %20 = vector.load %arg8[%c0_16, %c0_17] : memref<8x128xf32, #tpu.memory_space<vmem>>, vector<8x128xf32>
      %c0_18 = arith.constant 0 : index
      %c0_19 = arith.constant 0 : index
      %21 = vector.load %arg6[%c0_18, %c0_19] : memref<1x128xf32, #tpu.memory_space<vmem>>, vector<1x128xf32>
      %22 = vector.broadcast %21 : vector<1x128xf32> to vector<8x128xf32>
      %23 = arith.addf %20, %22 : vector<8x128xf32>
      %c0_20 = arith.constant 0 : index
      %c0_21 = arith.constant 0 : index
      %24 = vector.load %arg7[%c0_20, %c0_21] : memref<8x128xf32, #tpu.memory_space<vmem>>, vector<8x128xf32>
      tpu.vector_store %arg7[%c0_20, %c0_21], %23 {strides = array<i32>} : memref<8x128xf32, #tpu.memory_space<vmem>>, vector<8x128xf32>,
    } else {
    }
    return
  }
  func.func @transform_0(%arg0: i32, %arg1: i32) -> (i32, i32) {
    %c0_i32 = arith.constant 0 : i32
    %c0_i32_0 = arith.constant 0 : i32
    return %arg0, %c0_i32 : i32, i32
  }
  func.func @transform_1(%arg0: i32, %arg1: i32) -> (i32, i32) {
    %c0_i32 = arith.constant 0 : i32
    %c0_i32_0 = arith.constant 0 : i32
    return %c0_i32, %arg1 : i32, i32
  }
  func.func @transform_2(%arg0: i32, %arg1: i32) -> (i32, i32) {
    %c0_i32 = arith.constant 0 : i32
    %c0_i32_0 = arith.constant 0 : i32
    return %c0_i32, %arg1 : i32, i32
  }
  func.func @transform_3(%arg0: i32, %arg1: i32) -> (i32, i32) {
    %c0_i32 = arith.constant 0 : i32
    %c0_i32_0 = arith.constant 0 : i32
    return %arg1, %c0_i32 : i32, i32
  }
  func.func @transform_4(%arg0: i32, %arg1: i32) -> (i32, i32) {
    %c0_i32 = arith.constant 0 : i32
    %c0_i32_0 = arith.constant 0 : i32
    %c0_i32_1 = arith.constant 0 : i32
    return %c0_i32, %c0_i32_0 : i32, i32
  }
  func.func @transform_5(%arg0: i32, %arg1: i32) -> (i32, i32) {
    %c0_i32 = arith.constant 0 : i32
    %c0_i32_0 = arith.constant 0 : i32
    return %arg0, %c0_i32 : i32, i32
  }
}

</mosaic_0001>

<llo_original>
// kernel: feedforward_pallas.1
$region0: #{feedforward_pallas.1}
  #allocation0 [shape = 'u32[]', space=smem, size = 0x4, offset = 0x4, fixed_abs, tag = 'smem constant byte address 0x4 - core index']
  #allocation1 [shape = 'u32[144,128]{1,0:T(1,128)}', space=vmem, size = 0x12000, scoped, tag = 'internal scratch']
  #allocation2 [shape = 'f32[8,128]{1,0:T(8,128)}', space=vmem, size = 0x1000, scoped, tag = 'scratch operand']
  %s0 = inlined_call_operand.hbm [shape: f32[16,128], index: 0, kind: input, shape index: {}]
  %s1 = inlined_call_operand.hbm [shape: f32[128,256], index: 1, kind: input, shape index: {}]
  %s2 = inlined_call_operand.vmem [shape: f32[1,256], index: 2, kind: input, shape index: {}]
  %s3 = inlined_call_operand.hbm [shape: f32[256,128], index: 3, kind: input, shape index: {}]
  %s4 = inlined_call_operand.vmem [shape: f32[1,128], index: 4, kind: input, shape index: {}]
  %s5 = inlined_call_operand.hbm [shape: f32[16,128], index: 5, kind: output, shape index: {}]
  %s6 = sld [smem:[#allocation0]]
  $region73: #{feedforward_pallas.1} parent=0
    _
  %s8 = ssub.s32 1, %s6
  %s9 = scalar_select 0, %s8, %s6
  $region1: #{feedforward_pallas.1} parent=0
    #allocation3 [shape = 'u8[8192]{0}', space=vmem, size = 0x2000, scoped, tag = 'input window, operand 0']
    #allocation4 [shape = 's32[2]{0}', space=sflag, size = 0x8, scoped, tag = 'scoped memory for feedforward_pallas.1']
    #allocation5 [shape = 's32[2]{0}', space=sflag, size = 0x8, scoped, tag = 'scoped memory for feedforward_pallas.1']
    #allocation6 [shape = 'u8[131072]{0}', space=vmem, size = 0x20000, scoped, tag = 'input window, operand 1, single buffered']
    #allocation7 [shape = 's32[1]{0}', space=sflag, size = 0x4, scoped, tag = 'scoped memory for feedforward_pallas.1']
    #allocation8 [shape = 'u8[131072]{0}', space=vmem, size = 0x20000, scoped, tag = 'input window, operand 3, single buffered']
    #allocation9 [shape = 'u8[8192]{0}', space=vmem, size = 0x2000, scoped, tag = 'output window, operand 0']
    %10 = vsyncpa [#allocation4], 0
    %s11 = scalar_lea.sflag [#allocation4], 1
    %12 = vsyncpa %s11, 0
    %13 = vsyncpa [#allocation7], 0
    %14 = vsyncpa [#allocation5], 0
    %s15 = scalar_lea.sflag [#allocation5], 1
    %16 = vsyncpa %s15, 0
    loop: start=0, step=1, limit=4
    $region2: #{feedforward_pallas.1} parent=1 // loop_pre_header
      _
    $region3: #{feedforward_pallas.1} parent=1 // loop_header
      %s18 = sphi 0, %s22
      %p19 = scmp.ge.s32.totalorder %s18, 4
      %s25 = sphi 0, %s37
      %s26 = sphi 0, %s33
      %s27 = sphi 0, %s25
      %s28 = sphi 0, %s26
      %s29 = sphi 0, %s27
      %s30 = sphi 0, %s28
      %s40 = sphi 0, %s42
      %s43 = sphi 0, %s40
      %s44 = sphi 0, %s43
      %s60 = sphi 0, %s44
      %s66 = sphi 0, %s68
      %s69 = sphi 0, %s66
      %s70 = sphi 0, %s69
      %s86 = sphi 0, %s70
      %s92 = sphi 0, %s94
      %s95 = sphi 0, %s92
      %s96 = sphi 0, %s95
      %s112 = sphi 0, %s96
      %s118 = sphi 0, %s120
      %s121 = sphi 0, %s118
      %s122 = sphi 0, %s121
      %s138 = sphi 0, %s122
      %s142 = sphi 0, %s142
      %s144 = sphi 0, %s142
      %s145 = sphi 0, %s144
      %s159 = sphi 0, %s145
      %s165 = sphi 0, %s167
      %s168 = sphi 0, %s165
      %s169 = sphi 0, %s168
      %s185 = sphi 0, %s169
    $region4: #{feedforward_pallas.1} parent=1 // loop_header_branch
      %21 = sbr.rel (%p19) target = $region8
    $region5: #{feedforward_pallas.1} parent=1 // loop_body
      %s23 = ssub.s32 %s18, 1
      %s24 = ssub.s32 %s18, 2
      %s31 = sadd.s32 1, %s26
      %p32 = scmp.ge.s32.totalorder %s31, 1
      %s33 = scalar_select %p32, 0, %s31
      %s34 = sadd.s32 1, %s25
      %s35 = scalar_select %p32, %s34, %s25
      %p36 = scmp.ge.s32.totalorder %s35, 2
      %s37 = scalar_select %p36, 0, %s35
      %s38 = ssub.s32 %s25, %s37
      %p39 = scmp.eq.s32.totalorder %s38, 0
      %s41 = sadd.s32 %s40, 1
      %s42 = scalar_select %p39, %s40, %s41
      %p45 = pneg %p39
      %p46 = scmp.eq.s32.totalorder %s18, 1
      %p47 = por %p45, %p46
      %p48 = scmp.ne.s32.totalorder %s40, %s43
      %p49 = scmp.eq.s32.totalorder %s18, 0
      %p50 = por %p48, %p49
      %p51 = scmp.ne.s32.totalorder %s40, %s43
      %p52 = scmp.eq.s32.totalorder %s23, 1
      %p53 = por %p51, %p52
      %p54 = scmp.ne.s32.totalorder %s43, %s44
      %p55 = scmp.eq.s32.totalorder %s23, 0
      %p56 = por %p54, %p55
      %p57 = scmp.ne.s32.totalorder %s43, %s44
      %p58 = scmp.eq.s32.totalorder %s24, 1
      %p59 = por %p57, %p58
      %p61 = scmp.ne.s32.totalorder %s44, %s60
      %p62 = scmp.eq.s32.totalorder %s24, 0
      %p63 = por %p61, %p62
      %s64 = ssub.s32 %s26, %s33
      %p65 = scmp.eq.s32.totalorder %s64, 0
      %s67 = sadd.s32 %s66, 1
      %s68 = scalar_select %p65, %s66, %s67
      %p71 = pneg %p65
      %p72 = scmp.eq.s32.totalorder %s18, 1
      %p73 = por %p71, %p72
      %p74 = scmp.ne.s32.totalorder %s66, %s69
      %p75 = scmp.eq.s32.totalorder %s18, 0
      %p76 = por %p74, %p75
      %p77 = scmp.ne.s32.totalorder %s66, %s69
      %p78 = scmp.eq.s32.totalorder %s23, 1
      %p79 = por %p77, %p78
      %p80 = scmp.ne.s32.totalorder %s69, %s70
      %p81 = scmp.eq.s32.totalorder %s23, 0
      %p82 = por %p80, %p81
      %p83 = scmp.ne.s32.totalorder %s69, %s70
      %p84 = scmp.eq.s32.totalorder %s24, 1
      %p85 = por %p83, %p84
      %p87 = scmp.ne.s32.totalorder %s70, %s86
      %p88 = scmp.eq.s32.totalorder %s24, 0
      %p89 = por %p87, %p88
      %s90 = ssub.s32 %s26, %s33
      %p91 = scmp.eq.s32.totalorder %s90, 0
      %s93 = sadd.s32 %s92, 1
      %s94 = scalar_select %p91, %s92, %s93
      %p97 = pneg %p91
      %p98 = scmp.eq.s32.totalorder %s18, 1
      %p99 = por %p97, %p98
      %p100 = scmp.ne.s32.totalorder %s92, %s95
      %p101 = scmp.eq.s32.totalorder %s18, 0
      %p102 = por %p100, %p101
      %p103 = scmp.ne.s32.totalorder %s92, %s95
      %p104 = scmp.eq.s32.totalorder %s23, 1
      %p105 = por %p103, %p104
      %p106 = scmp.ne.s32.totalorder %s95, %s96
      %p107 = scmp.eq.s32.totalorder %s23, 0
      %p108 = por %p106, %p107
      %p109 = scmp.ne.s32.totalorder %s95, %s96
      %p110 = scmp.eq.s32.totalorder %s24, 1
      %p111 = por %p109, %p110
      %p113 = scmp.ne.s32.totalorder %s96, %s112
      %p114 = scmp.eq.s32.totalorder %s24, 0
      %p115 = por %p113, %p114
      %s116 = ssub.s32 %s26, %s33
      %p117 = scmp.eq.s32.totalorder %s116, 0
      %s119 = sadd.s32 %s118, 1
      %s120 = scalar_select %p117, %s118, %s119
      %p123 = pneg %p117
      %p124 = scmp.eq.s32.totalorder %s18, 1
      %p125 = por %p123, %p124
      %p126 = scmp.ne.s32.totalorder %s118, %s121
      %p127 = scmp.eq.s32.totalorder %s18, 0
      %p128 = por %p126, %p127
      %p129 = scmp.ne.s32.totalorder %s118, %s121
      %p130 = scmp.eq.s32.totalorder %s23, 1
      %p131 = por %p129, %p130
      %p132 = scmp.ne.s32.totalorder %s121, %s122
      %p133 = scmp.eq.s32.totalorder %s23, 0
      %p134 = por %p132, %p133
      %p135 = scmp.ne.s32.totalorder %s121, %s122
      %p136 = scmp.eq.s32.totalorder %s24, 1
      %p137 = por %p135, %p136
      %p139 = scmp.ne.s32.totalorder %s122, %s138
      %p140 = scmp.eq.s32.totalorder %s24, 0
      %p141 = por %p139, %p140
      %s143 = sadd.s32 %s142, 1
      %p146 = scmp.eq.s32.totalorder %s18, 1
      %p147 = scmp.ne.s32.totalorder %s142, %s144
      %p148 = scmp.eq.s32.totalorder %s18, 0
      %p149 = por %p147, %p148
      %p150 = scmp.ne.s32.totalorder %s142, %s144
      %p151 = scmp.eq.s32.totalorder %s23, 1
      %p152 = por %p150, %p151
      %p153 = scmp.ne.s32.totalorder %s144, %s145
      %p154 = scmp.eq.s32.totalorder %s23, 0
      %p155 = por %p153, %p154
      %p156 = scmp.ne.s32.totalorder %s144, %s145
      %p157 = scmp.eq.s32.totalorder %s24, 1
      %p158 = por %p156, %p157
      %p160 = scmp.ne.s32.totalorder %s145, %s159
      %p161 = scmp.eq.s32.totalorder %s24, 0
      %p162 = por %p160, %p161
      %s163 = ssub.s32 %s25, %s37
      %p164 = scmp.eq.s32.totalorder %s163, 0
      %s166 = sadd.s32 %s165, 1
      %s167 = scalar_select %p164, %s165, %s166
      %p170 = pneg %p164
      %p171 = scmp.eq.s32.totalorder %s18, 1
      %p172 = por %p170, %p171
      %p173 = scmp.ne.s32.totalorder %s165, %s168
      %p174 = scmp.eq.s32.totalorder %s18, 0
      %p175 = por %p173, %p174
      %p176 = scmp.ne.s32.totalorder %s165, %s168
      %p177 = scmp.eq.s32.totalorder %s23, 1
      %p178 = por %p176, %p177
      %p179 = scmp.ne.s32.totalorder %s168, %s169
      %p180 = scmp.eq.s32.totalorder %s23, 0
      %p181 = por %p179, %p180
      %p182 = scmp.ne.s32.totalorder %s168, %s169
      %p183 = scmp.eq.s32.totalorder %s24, 1
      %p184 = por %p182, %p183
      %p186 = scmp.ne.s32.totalorder %s169, %s185
      %p187 = scmp.eq.s32.totalorder %s24, 0
      %p188 = por %p186, %p187
      %p189 = scmp.le.s32.totalorder 1, %s18
      %p190 = scmp.lt.s32.totalorder %s18, 3
      %p191 = pnand %p189, %p190
      %p192 = pneg %p191
      // Predicated region
      $region9: #{feedforward_pallas.1} parent=5 // pred_check
        _
      $region10: #{feedforward_pallas.1} parent=5 // pred_check_branch
        %194 = sbr.rel (%p191) target = $region12
      $region11: #{feedforward_pallas.1} parent=5 // pred_region
        %s195 = ssub.s32 %s18, 1
        // Predicated region
        $region13: #{feedforward_pallas.1} parent=11 // pred_check
          %p196 = pneg %p82
        $region14: #{feedforward_pallas.1} parent=11 // pred_check_branch
          %198 = sbr.rel (%p196) target = $region16
        $region15: #{feedforward_pallas.1} parent=11 // pred_region
          %s199 = smul.u32 2, %s28
          %s201 = ssub.s32 4096, 4096
          %202 = vsyncadd [#allocation7], %s201
          %s203 = smul.addr %s199, 128
          %s204 = scalar_lea.hbm %s1, %s203
          %s205 = sshll.u32 [#allocation6], 4
          %s206 = int_to_ptr.vmem [resolvable:$true] %s205
          %211 = dma.hbm_to_vmem [thread:$0]  %s204, 4096, %s206, [#allocation7], 256, 256, 16
        $region16: #{feedforward_pallas.1} parent=11 // pred_fallthru
          _
        // Predicated region
        $region17: #{feedforward_pallas.1} parent=11 // pred_check
          %p212 = pneg %p108
        $region18: #{feedforward_pallas.1} parent=11 // pred_check_branch
          %214 = sbr.rel (%p212) target = $region20
        $region19: #{feedforward_pallas.1} parent=11 // pred_region
          %s215 = smul.u32 2, %s28
          %p216 = scmp.lt.s32.totalorder %s215, 1
          %s217 = scalar_select %p216, %s215, 1
          %s218 = scalar_lea.vmem %s2, %s217
          %s219 = smul.u32 2, %s28
        $region20: #{feedforward_pallas.1} parent=11 // pred_fallthru
          _
        // Predicated region
        $region21: #{feedforward_pallas.1} parent=11 // pred_check
          %p220 = pneg %p134
        $region22: #{feedforward_pallas.1} parent=11 // pred_check_branch
          %222 = sbr.rel (%p220) target = $region24
        $region23: #{feedforward_pallas.1} parent=11 // pred_region
          %s223 = smul.u32 32, %s28
          %s225 = ssub.s32 4096, 4096
          %226 = vsyncadd [#allocation7], %s225
          %s227 = smul.addr %s223, 128
          %s228 = scalar_lea.hbm %s3, %s227
          %s229 = sshll.u32 [#allocation8], 4
          %s230 = int_to_ptr.vmem [resolvable:$true] %s229
          %235 = dma.hbm_to_vmem [thread:$0]  %s228, 4096, %s230, [#allocation7], 128, 128, 8
        $region24: #{feedforward_pallas.1} parent=11 // pred_fallthru
          _
        // Predicated region
        $region25: #{feedforward_pallas.1} parent=11 // pred_check
          %p236 = pneg %p155
        $region26: #{feedforward_pallas.1} parent=11 // pred_check_branch
          %238 = sbr.rel (%p236) target = $region28
        $region27: #{feedforward_pallas.1} parent=11 // pred_region
          _
        $region28: #{feedforward_pallas.1} parent=11 // pred_fallthru
          _
      $region12: #{feedforward_pallas.1} parent=5 // pred_fallthru
        _
      %p239 = scmp.lt.s32.totalorder %s18, 2
      // Predicated region
      $region29: #{feedforward_pallas.1} parent=5 // pred_check
        %p240 = pneg %p239
      $region30: #{feedforward_pallas.1} parent=5 // pred_check_branch
        %242 = sbr.rel (%p240) target = $region32
      $region31: #{feedforward_pallas.1} parent=5 // pred_region
        // Predicated region
        $region33: #{feedforward_pallas.1} parent=31 // pred_check
          %p243 = pneg %p50
        $region34: #{feedforward_pallas.1} parent=31 // pred_check_branch
          %245 = sbr.rel (%p243) target = $region36
        $region35: #{feedforward_pallas.1} parent=31 // pred_region
          %s246 = sand.u32 %s40, 1
          %s247 = scalar_lea.sflag [#allocation4], %s246
          %s248 = sand.u32 %s40, 1
          %s249 = smul.addr %s248, 8
          %s250 = scalar_lea.vmem [#allocation3], %s249
          %s252 = ssub.s32 128, 128
          %253 = vsyncadd %s247, %s252
          %s254 = smul.addr %s25, 128
          %s255 = scalar_lea.hbm %s0, %s254
          %s257 = sshll.u32 %s250, 4
          %s258 = int_to_ptr.vmem [resolvable:$true] %s257
          %260 = dma.hbm_to_vmem [thread:$0]  %s255, 128, %s258, %s247
        $region36: #{feedforward_pallas.1} parent=31 // pred_fallthru
          _
      $region32: #{feedforward_pallas.1} parent=5 // pred_fallthru
        _
      %p261 = scmp.le.s32.totalorder 1, %s18
      %p262 = scmp.lt.s32.totalorder %s18, 3
      %p263 = pnand %p261, %p262
      %p264 = pneg %p263
      // Predicated region
      $region37: #{feedforward_pallas.1} parent=5 // pred_check
        _
      $region38: #{feedforward_pallas.1} parent=5 // pred_check_branch
        %266 = sbr.rel (%p263) target = $region40
      $region39: #{feedforward_pallas.1} parent=5 // pred_region
        %s267 = ssub.s32 %s18, 1
        %s268 = sand.u32 %s43, 1
        %s269 = scalar_lea.sflag [#allocation4], %s268
        %s270 = sand.u32 %s43, 1
        %s271 = smul.addr %s270, 8
        %s272 = scalar_lea.vmem [#allocation3], %s271
        // Predicated region
        $region41: #{feedforward_pallas.1} parent=39 // pred_check
          %p273 = pneg %p56
        $region42: #{feedforward_pallas.1} parent=39 // pred_check_branch
          %275 = sbr.rel (%p273) target = $region44
        $region43: #{feedforward_pallas.1} parent=39 // pred_region
          %276 = dma.done %s269, 128
        $region44: #{feedforward_pallas.1} parent=39 // pred_fallthru
          _
        // Predicated region
        $region45: #{feedforward_pallas.1} parent=39 // pred_check
          %p277 = pneg %p82
        $region46: #{feedforward_pallas.1} parent=39 // pred_check_branch
          %279 = sbr.rel (%p277) target = $region48
        $region47: #{feedforward_pallas.1} parent=39 // pred_region
          %280 = dma.done [#allocation7], 4096
        $region48: #{feedforward_pallas.1} parent=39 // pred_fallthru
          _
        // Predicated region
        $region49: #{feedforward_pallas.1} parent=39 // pred_check
          %p281 = pneg %p134
        $region50: #{feedforward_pallas.1} parent=39 // pred_check_branch
          %283 = sbr.rel (%p281) target = $region52
        $region51: #{feedforward_pallas.1} parent=39 // pred_region
          %284 = dma.done [#allocation7], 4096
        $region52: #{feedforward_pallas.1} parent=39 // pred_fallthru
          _
        %s285 = sand.u32 %s43, 1
        %s286 = scalar_lea.sflag [#allocation4], %s285
        %s287 = sand.u32 %s43, 1
        %s288 = smul.addr %s287, 8
        %s289 = scalar_lea.vmem [#allocation3], %s288
        %p290 = pneg %p56
        %p291 = pneg %p53
        %p292 = pneg %p82
        %p293 = pneg %p79
        %s294 = smul.u32 2, %s28
        %p295 = scmp.lt.s32.totalorder %s294, 1
        %s296 = scalar_select %p295, %s294, 1
        %s297 = scalar_lea.vmem %s2, %s296
        %p298 = pneg %p108
        %p299 = pneg %p105
        %p300 = pneg %p134
        %p301 = pneg %p131
        %p302 = pneg %p155
        %p303 = pneg %p152
        %p304 = pneg %p181
        %p305 = pneg %p178
        %s306 = sand.u32 %s168, 1
        %s307 = scalar_lea.sflag [#allocation5], %s306
        %s308 = sand.u32 %s168, 1
        %s309 = smul.addr %s308, 8
        %s310 = scalar_lea.vmem [#allocation9], %s309
        %s311 = smul.u32 2, %s28
        %s312 = smul.u32 2, %s28
        %p313 = scmp.lt.s32.totalorder %s312, 1
        %s314 = scalar_select %p313, %s312, 1
        %s315 = scalar_lea.vmem %s2, %s314
        %s316 = smul.u32 2, %s28
        %s317 = smul.u32 32, %s28
        %p318 = scmp.eq.s32.totalorder %s28, 0
        // Predicated region
        $region53: #{feedforward_pallas.1} parent=39 // pred_check
          %p319 = pneg %p318
        $region54: #{feedforward_pallas.1} parent=39 // pred_check_branch
          %321 = sbr.rel (%p319) target = $region56
        $region55: #{feedforward_pallas.1} parent=39 // pred_region
          %322 = vst [vmem:[#allocation2] sm:$0xff] 0.0
        $region56: #{feedforward_pallas.1} parent=39 // pred_fallthru
          _
        %v323 = vld [vmem:[%s272] sm:$0xff]
        %v324 = vld [vmem:[#allocation6] sm:$0xff]
        %v325 = vld [vmem:[#allocation6 + $0x8] sm:$0xff]
        %v326 = vld [vmem:[#allocation6 + $0x10] sm:$0xff]
        %v327 = vld [vmem:[#allocation6 + $0x18] sm:$0xff]
        %v328 = vld [vmem:[#allocation6 + $0x20] sm:$0xff]
        %v329 = vld [vmem:[#allocation6 + $0x28] sm:$0xff]
        %v330 = vld [vmem:[#allocation6 + $0x30] sm:$0xff]
        %v331 = vld [vmem:[#allocation6 + $0x38] sm:$0xff]
        %v332 = vld [vmem:[#allocation6 + $0x40] sm:$0xff]
        %v333 = vld [vmem:[#allocation6 + $0x48] sm:$0xff]
        %v334 = vld [vmem:[#allocation6 + $0x50] sm:$0xff]
        %v335 = vld [vmem:[#allocation6 + $0x58] sm:$0xff]
        %v336 = vld [vmem:[#allocation6 + $0x60] sm:$0xff]
        %v337 = vld [vmem:[#allocation6 + $0x68] sm:$0xff]
        %v338 = vld [vmem:[#allocation6 + $0x70] sm:$0xff]
        %v339 = vld [vmem:[#allocation6 + $0x78] sm:$0xff]
        %v340 = vld [vmem:[#allocation6 + $0x80] sm:$0xff]
        %v341 = vld [vmem:[#allocation6 + $0x88] sm:$0xff]
        %v342 = vld [vmem:[#allocation6 + $0x90] sm:$0xff]
        %v343 = vld [vmem:[#allocation6 + $0x98] sm:$0xff]
        %v344 = vld [vmem:[#allocation6 + $0xa0] sm:$0xff]
        %v345 = vld [vmem:[#allocation6 + $0xa8] sm:$0xff]
        %v346 = vld [vmem:[#allocation6 + $0xb0] sm:$0xff]
        %v347 = vld [vmem:[#allocation6 + $0xb8] sm:$0xff]
        %v348 = vld [vmem:[#allocation6 + $0xc0] sm:$0xff]
        %v349 = vld [vmem:[#allocation6 + $0xc8] sm:$0xff]
        %v350 = vld [vmem:[#allocation6 + $0xd0] sm:$0xff]
        %v351 = vld [vmem:[#allocation6 + $0xd8] sm:$0xff]
        %v352 = vld [vmem:[#allocation6 + $0xe0] sm:$0xff]
        %v353 = vld [vmem:[#allocation6 + $0xe8] sm:$0xff]
        %v354 = vld [vmem:[#allocation6 + $0xf0] sm:$0xff]
        %v355 = vld [vmem:[#allocation6 + $0xf8] sm:$0xff]
        %v356 = vld [vmem:[%s315] sm:$0x3]
        %v358 = vlaneseq
        %v359 = vshrl.u32 %v358, 7
        %v360 = vsub.s32 0, %v359
        %v361 = vrot.slane %v356, %v360
        %v362 = vlaneseq
        %v363 = vshrl.u32 %v362, 7
        %v364 = vsub.s32 1, %v363
        %v365 = vrot.slane %v356, %v364
        %368 = vmatprep.subr.mxu0 %v355
        %369 = vmatpush1.msra.mxu0 %v354
        %370 = vmatprep.subr.mxu0 %v353
        %371 = vmatpush1.msra.mxu0 %v352
        %372 = vmatprep.subr.mxu0 %v351
        %373 = vmatpush1.msra.mxu0 %v350
        %374 = vmatprep.subr.mxu0 %v349
        %375 = vmatpush1.msra.mxu0 %v348
        %376 = vmatprep.subr.mxu0 %v347
        %377 = vmatpush1.msra.mxu0 %v346
        %378 = vmatprep.subr.mxu0 %v345
        %379 = vmatpush1.msra.mxu0 %v344
        %380 = vmatprep.subr.mxu0 %v343
        %381 = vmatpush1.msra.mxu0 %v342
        %382 = vmatprep.subr.mxu0 %v341
        %383 = vmatpush1.msra.mxu0 %v340
        %384 = vmatprep.subr.mxu0 %v339
        %385 = vmatpush1.msra.mxu0 %v338
        %386 = vmatprep.subr.mxu0 %v337
        %387 = vmatpush1.msra.mxu0 %v336
        %388 = vmatprep.subr.mxu0 %v335
        %389 = vmatpush1.msra.mxu0 %v334
        %390 = vmatprep.subr.mxu0 %v333
        %391 = vmatpush1.msra.mxu0 %v332
        %392 = vmatprep.subr.mxu0 %v331
        %393 = vmatpush1.msra.mxu0 %v330
        %394 = vmatprep.subr.mxu0 %v329
        %395 = vmatpush1.msra.mxu0 %v328
        %396 = vmatprep.subr.mxu0 %v327
        %397 = vmatpush1.msra.mxu0 %v326
        %398 = vmatprep.subr.mxu0 %v325
        %399 = vmatpush1.msra.mxu0 %v324
        %400 = vmatprep.subr.mxu0 0.0
        %401 = vmatpush2.msra.mxu0 0.0
        %402 = vmatprep.subr.mxu0 0.0
        %403 = vmatpush2.msra.mxu0 0.0
        %404 = vmatprep.subr.mxu0 0.0
        %405 = vmatpush2.msra.mxu0 0.0
        %406 = vmatprep.subr.mxu0 0.0
        %407 = vmatpush2.msra.mxu0 0.0
        %408 = vmatprep.subr.mxu0 0.0
        %409 = vmatpush2.msra.mxu0 0.0
        %410 = vmatprep.subr.mxu0 0.0
        %411 = vmatpush2.msra.mxu0 0.0
        %412 = vmatprep.subr.mxu0 0.0
        %413 = vmatpush2.msra.mxu0 0.0
        %414 = vmatprep.subr.mxu0 0.0
        %415 = vmatpush2.msra.mxu0 0.0
        %416 = vmatprep.subr.mxu0 0.0
        %417 = vmatpush2.msra.mxu0 0.0
        %418 = vmatprep.subr.mxu0 0.0
        %419 = vmatpush2.msra.mxu0 0.0
        %420 = vmatprep.subr.mxu0 0.0
        %421 = vmatpush2.msra.mxu0 0.0
        %422 = vmatprep.subr.mxu0 0.0
        %423 = vmatpush2.msra.mxu0 0.0
        %424 = vmatprep.subr.mxu0 0.0
        %425 = vmatpush2.msra.mxu0 0.0
        %426 = vmatprep.subr.mxu0 0.0
        %427 = vmatpush2.msra.mxu0 0.0
        %428 = vmatprep.subr.mxu0 0.0
        %429 = vmatpush2.msra.mxu0 0.0
        %430 = vmatprep.subr.mxu0 0.0
        %431 = vmatpush2.msra.mxu0 0.0
        %432 = vmatprep.mubr.f32.mxu0 0.0
        %433 = vmatmul.mubr.f32.gmra.mxu0 %v323
        %v434 = vpop.f32.mrf.mxu0
        %v435 = vadd.f32 %v361, %v434
        %v436 = vpop.f32.mrf.mxu0
        %v437 = vadd.f32 %v365, %v436
        %438 = vdwg.mxu0
        %v439 = vmul.f32 %v435, 0.01
        %v440 = vmul.f32 %v437, 0.01
        %v441 = vmax.f32 %v435, %v439
        %v442 = vmax.f32 %v437, %v440
        %v443 = vld [vmem:[#allocation2] sm:$0xff]
        %v444 = vld [vmem:[#allocation8] sm:$0xff]
        %v445 = vld [vmem:[#allocation8 + $0x8] sm:$0xff]
        %v446 = vld [vmem:[#allocation8 + $0x10] sm:$0xff]
        %v447 = vld [vmem:[#allocation8 + $0x18] sm:$0xff]
        %v448 = vld [vmem:[#allocation8 + $0x20] sm:$0xff]
        %v449 = vld [vmem:[#allocation8 + $0x28] sm:$0xff]
        %v450 = vld [vmem:[#allocation8 + $0x30] sm:$0xff]
        %v451 = vld [vmem:[#allocation8 + $0x38] sm:$0xff]
        %v452 = vld [vmem:[#allocation8 + $0x40] sm:$0xff]
        %v453 = vld [vmem:[#allocation8 + $0x48] sm:$0xff]
        %v454 = vld [vmem:[#allocation8 + $0x50] sm:$0xff]
        %v455 = vld [vmem:[#allocation8 + $0x58] sm:$0xff]
        %v456 = vld [vmem:[#allocation8 + $0x60] sm:$0xff]
        %v457 = vld [vmem:[#allocation8 + $0x68] sm:$0xff]
        %v458 = vld [vmem:[#allocation8 + $0x70] sm:$0xff]
        %v459 = vld [vmem:[#allocation8 + $0x78] sm:$0xff]
        %v460 = vld [vmem:[#allocation8 + $0x80] sm:$0xff]
        %v461 = vld [vmem:[#allocation8 + $0x88] sm:$0xff]
        %v462 = vld [vmem:[#allocation8 + $0x90] sm:$0xff]
        %v463 = vld [vmem:[#allocation8 + $0x98] sm:$0xff]
        %v464 = vld [vmem:[#allocation8 + $0xa0] sm:$0xff]
        %v465 = vld [vmem:[#allocation8 + $0xa8] sm:$0xff]
        %v466 = vld [vmem:[#allocation8 + $0xb0] sm:$0xff]
        %v467 = vld [vmem:[#allocation8 + $0xb8] sm:$0xff]
        %v468 = vld [vmem:[#allocation8 + $0xc0] sm:$0xff]
        %v469 = vld [vmem:[#allocation8 + $0xc8] sm:$0xff]
        %v470 = vld [vmem:[#allocation8 + $0xd0] sm:$0xff]
        %v471 = vld [vmem:[#allocation8 + $0xd8] sm:$0xff]
        %v472 = vld [vmem:[#allocation8 + $0xe0] sm:$0xff]
        %v473 = vld [vmem:[#allocation8 + $0xe8] sm:$0xff]
        %v474 = vld [vmem:[#allocation8 + $0xf0] sm:$0xff]
        %v475 = vld [vmem:[#allocation8 + $0xf8] sm:$0xff]
        %476 = vmatprep.subr.mxu0 0.0
        %477 = vmatpush1.msra.mxu0 %v459
        %478 = vmatprep.subr.mxu0 0.0
        %479 = vmatpush1.msra.mxu0 %v458
        %480 = vmatprep.subr.mxu0 0.0
        %481 = vmatpush1.msra.mxu0 %v457
        %482 = vmatprep.subr.mxu0 0.0
        %483 = vmatpush1.msra.mxu0 %v456
        %484 = vmatprep.subr.mxu0 0.0
        %485 = vmatpush1.msra.mxu0 %v455
        %486 = vmatprep.subr.mxu0 0.0
        %487 = vmatpush1.msra.mxu0 %v454
        %488 = vmatprep.subr.mxu0 0.0
        %489 = vmatpush1.msra.mxu0 %v453
        %490 = vmatprep.subr.mxu0 0.0
        %491 = vmatpush1.msra.mxu0 %v452
        %492 = vmatprep.subr.mxu0 0.0
        %493 = vmatpush1.msra.mxu0 %v451
        %494 = vmatprep.subr.mxu0 0.0
        %495 = vmatpush1.msra.mxu0 %v450
        %496 = vmatprep.subr.mxu0 0.0
        %497 = vmatpush1.msra.mxu0 %v449
        %498 = vmatprep.subr.mxu0 0.0
        %499 = vmatpush1.msra.mxu0 %v448
        %500 = vmatprep.subr.mxu0 0.0
        %501 = vmatpush1.msra.mxu0 %v447
        %502 = vmatprep.subr.mxu0 0.0
        %503 = vmatpush1.msra.mxu0 %v446
        %504 = vmatprep.subr.mxu0 0.0
        %505 = vmatpush1.msra.mxu0 %v445
        %506 = vmatprep.subr.mxu0 0.0
        %507 = vmatpush1.msra.mxu0 %v444
        %508 = vmatprep.subr.mxu0 0.0
        %509 = vmatpush2.msra.mxu0 %v475
        %510 = vmatprep.subr.mxu0 0.0
        %511 = vmatpush2.msra.mxu0 %v474
        %512 = vmatprep.subr.mxu0 0.0
        %513 = vmatpush2.msra.mxu0 %v473
        %514 = vmatprep.subr.mxu0 0.0
        %515 = vmatpush2.msra.mxu0 %v472
        %516 = vmatprep.subr.mxu0 0.0
        %517 = vmatpush2.msra.mxu0 %v471
        %518 = vmatprep.subr.mxu0 0.0
        %519 = vmatpush2.msra.mxu0 %v470
        %520 = vmatprep.subr.mxu0 0.0
        %521 = vmatpush2.msra.mxu0 %v469
        %522 = vmatprep.subr.mxu0 0.0
        %523 = vmatpush2.msra.mxu0 %v468
        %524 = vmatprep.subr.mxu0 0.0
        %525 = vmatpush2.msra.mxu0 %v467
        %526 = vmatprep.subr.mxu0 0.0
        %527 = vmatpush2.msra.mxu0 %v466
        %528 = vmatprep.subr.mxu0 0.0
        %529 = vmatpush2.msra.mxu0 %v465
        %530 = vmatprep.subr.mxu0 0.0
        %531 = vmatpush2.msra.mxu0 %v464
        %532 = vmatprep.subr.mxu0 0.0
        %533 = vmatpush2.msra.mxu0 %v463
        %534 = vmatprep.subr.mxu0 0.0
        %535 = vmatpush2.msra.mxu0 %v462
        %536 = vmatprep.subr.mxu0 0.0
        %537 = vmatpush2.msra.mxu0 %v461
        %538 = vmatprep.subr.mxu0 0.0
        %539 = vmatpush2.msra.mxu0 %v460
        %540 = vmatprep.mubr.f32.mxu0 %v442
        %541 = vmatmul.mubr.f32.gmra.mxu0 %v441
        %v542 = vpop.f32.mrf.mxu0
        %v543 = vadd.f32 0.0, %v542
        %v544 = vpop.f32.mrf.mxu0
        %545 = vdwg.mxu0
        %v546 = vadd.f32 %v443, %v543
        %547 = vst [vmem:[#allocation2] sm:$0xff] %v546
        // Predicated region
        $region57: #{feedforward_pallas.1} parent=39 // pred_check
          %p548 = pneg %p318
        $region58: #{feedforward_pallas.1} parent=39 // pred_check_branch
          %550 = sbr.rel (%p548) target = $region60
        $region59: #{feedforward_pallas.1} parent=39 // pred_region
          %v551 = vld [vmem:[#allocation2] sm:$0xff]
          %v552 = vld [vmem:[%s4] sm:$0x1]
          %v554 = vlaneseq
          %v555 = vshrl.u32 %v554, 7
          %v556 = vsub.s32 0, %v555
          %v557 = vrot.slane %v552, %v556
          %v559 = vadd.f32 %v551, %v557
          %560 = vst [vmem:[%s310] sm:$0xff] %v559
        $region60: #{feedforward_pallas.1} parent=39 // pred_fallthru
          _
        %s561 = sand.u32 %s168, 1
        %s562 = scalar_lea.sflag [#allocation5], %s561
        %s563 = sand.u32 %s168, 1
        %s564 = smul.addr %s563, 8
        %s565 = scalar_lea.vmem [#allocation9], %s564
        // Predicated region
        $region61: #{feedforward_pallas.1} parent=39 // pred_check
          %p566 = pneg %p178
        $region62: #{feedforward_pallas.1} parent=39 // pred_check_branch
          %568 = sbr.rel (%p566) target = $region64
        $region63: #{feedforward_pallas.1} parent=39 // pred_region
          %s570 = ssub.s32 128, 128
          %571 = vsyncadd %s562, %s570
          %s572 = smul.addr %s27, 128
          %s573 = scalar_lea.hbm %s5, %s572
          %s575 = sshll.u32 %s565, 4
          %s576 = int_to_ptr.vmem [resolvable:$true] %s575
          %578 = dma.vmem_to_hbm [thread:$0]  %s576, 128, %s573, %s562
        $region64: #{feedforward_pallas.1} parent=39 // pred_fallthru
          _
      $region40: #{feedforward_pallas.1} parent=5 // pred_fallthru
        _
      %p579 = scmp.le.s32.totalorder 2, %s18
      // Predicated region
      $region65: #{feedforward_pallas.1} parent=5 // pred_check
        %p580 = pneg %p579
      $region66: #{feedforward_pallas.1} parent=5 // pred_check_branch
        %582 = sbr.rel (%p580) target = $region68
      $region67: #{feedforward_pallas.1} parent=5 // pred_region
        %s583 = ssub.s32 %s18, 2
        // Predicated region
        $region69: #{feedforward_pallas.1} parent=67 // pred_check
          %p584 = pneg %p184
        $region70: #{feedforward_pallas.1} parent=67 // pred_check_branch
          %586 = sbr.rel (%p584) target = $region72
        $region71: #{feedforward_pallas.1} parent=67 // pred_region
          %s587 = sand.u32 %s169, 1
          %s588 = scalar_lea.sflag [#allocation5], %s587
          %s589 = sand.u32 %s169, 1
          %s590 = smul.addr %s589, 8
          %s591 = scalar_lea.vmem [#allocation9], %s590
          %592 = dma.done %s588, 128
        $region72: #{feedforward_pallas.1} parent=67 // pred_fallthru
          _
      $region68: #{feedforward_pallas.1} parent=5 // pred_fallthru
        _
    $region6: #{feedforward_pallas.1} parent=1 // loop_footer
      %s22 = sadd.s32 1, %s18
    $region7: #{feedforward_pallas.1} parent=1 // loop_footer_branch
      %17 = sbr.rel target = $region3
    $region8: #{feedforward_pallas.1} parent=1 // loop_exit
      _
    %593 = vsyncpa [#allocation4], 1
    %s594 = scalar_lea.sflag [#allocation4], 1
    %595 = vsyncpa %s594, 1
    %596 = vsyncpa [#allocation7], 1
    %597 = vsyncpa [#allocation5], 1
    %s598 = scalar_lea.sflag [#allocation5], 1
    %599 = vsyncpa %s598, 1

</llo_original>
